<compile_context>
chip_gen: v6e
topology: v6e:2x2x1
jax: 0.10.0
libtpu: 0.0.40
codegen_flags: <defaults>
</compile_context>

<pallas_src>
import functools

import jax
import jax.numpy as jnp
from jax import lax
from jax.experimental import pallas as pl
from jax.experimental.pallas import tpu as pltpu


def _attention_kernel(x_ref, wq_ref, wk_ref, wvt_ref, o_ref, *, B, S, OUT):
    # x_ref:   (B*S, IN)
    # wq_ref:  (IN, OUT)      wk_ref: (IN, OUT)      wvt_ref: (OUT, IN)
    # o_ref:   (B, OUT, S)    -- module's native output layout, no wrapper transpose
    x = x_ref[...]
    wq = wq_ref[...]
    wk = wk_ref[...]
    wvt = wvt_ref[...]

    # Row-fused Q / K projections for all batches: one MXU matmul each (NN).
    q = jnp.dot(x, wq, preferred_element_type=jnp.float32)   # (B*S, OUT)
    k = jnp.dot(x, wk, preferred_element_type=jnp.float32)   # (B*S, OUT)

    # B is tiny and static -> unrolled Python loop inside the single grid step.
    for b in range(B):
        lo = b * S                                            # static, sublane-aligned
        x_b = x[lo:lo + S, :]                                 # (S, IN)
        q_b = q[lo:lo + S, :]                                 # (S, OUT)
        k_b = k[lo:lo + S, :]                                 # (S, OUT)

        # v_b^T[o, s] = sum_i Wv[i, o] x_b[s, i]  (NT matmul) -> (OUT, S)
        vt_b = lax.dot_general(wvt, x_b, (((1,), (1,)), ((), ())),
                               preferred_element_type=jnp.float32)

        # scores^T[j, i] = sum_s k[s, j] q[s, i] == scores[i, j]  (TN matmul)
        scores_t = lax.dot_general(k_b, q_b, (((0,), (0,)), ((), ())),
                                   preferred_element_type=jnp.float32)   # (OUT, OUT)

        # PyTorch Softmax(dim=1) over scores == softmax over the LAST axis of
        # scores^T -> lane-axis reduction.  Exact divide (accuracy is free here).
        m = jnp.max(scores_t, axis=-1, keepdims=True)
        e = jnp.exp(scores_t - m)
        p_t = e / jnp.sum(e, axis=-1, keepdims=True)                      # (OUT, OUT)

        # result[i, s] = sum_j p[i, j] v[s, j] = sum_j p_t[j, i] v^T[j, s]
        # (TN matmul) -> (OUT, S): stored directly in the module's output layout.
        out_b = lax.dot_general(p_t, vt_b, (((0,), (0,)), ((), ())),
                                preferred_element_type=jnp.float32)       # (OUT, S)
        o_ref[b] = out_b.astype(o_ref.dtype)


def make_attention(wq, wk, wv):
    """Build the attention callable.  All weight preprocessing happens ONCE here
    (init time), not on the per-call hot path."""
    wq = jnp.asarray(wq, jnp.float32)          # (IN, OUT)
    wk = jnp.asarray(wk, jnp.float32)          # (IN, OUT)
    wv_t = jnp.asarray(wv, jnp.float32).T      # (OUT, IN): pre-transposed so the
    #                                            kernel can emit (B, OUT, S) directly.
    IN, OUT = wq.shape

    @jax.jit
    def attention(x):
        B, S, _ = x.shape
        kernel = functools.partial(_attention_kernel, B=B, S=S, OUT=OUT)
        cost = pl.CostEstimate(
            flops=2 * B * S * IN * 3 * OUT + 4 * B * S * OUT * OUT,
            transcendentals=B * OUT * OUT,
            bytes_accessed=4 * (B * S * IN + 3 * IN * OUT + B * OUT * S),
        )
        vmem = pl.BlockSpec(memory_space=pltpu.MemorySpace.VMEM)
        return pl.pallas_call(
            kernel,
            out_shape=jax.ShapeDtypeStruct((B, OUT, S), jnp.float32),
            in_specs=[vmem, vmem, vmem, vmem],
            out_specs=vmem,
            cost_estimate=cost,
        )(x.reshape(B * S, IN), wq, wk, wv_t)   # reshape is metadata-only (contiguous)

    return attention


def attention_ref(x, wq, wk, wv):
    hp = jax.lax.Precision.HIGHEST
    q = jnp.einsum("bsi,io->bso", x, wq, precision=hp)
    k = jnp.einsum("bsi,io->bso", x, wk, precision=hp)
    v = jnp.einsum("bsi,io->bso", x, wv, precision=hp)
    scores = jnp.einsum("bso,bsp->bop", q, k, precision=hp)   # q.mT @ k
    p = jax.nn.softmax(scores, axis=1)                        # Softmax(dim=1)
    return jnp.einsum("bop,bsp->bos", p, v, precision=hp)     # p @ v.mT


if __name__ == "__main__":
    IN_SIZE, OUT_SIZE = 32, 32
    B, S = 2, 8

    key = jax.random.PRNGKey(0)
    kx, kq, kk, kv = jax.random.split(key, 4)
    x = jax.random.normal(kx, (B, S, IN_SIZE), dtype=jnp.float32)
    wq = jax.random.normal(kq, (IN_SIZE, OUT_SIZE), dtype=jnp.float32)
    wk = jax.random.normal(kk, (IN_SIZE, OUT_SIZE), dtype=jnp.float32)
    wv = jax.random.normal(kv, (IN_SIZE, OUT_SIZE), dtype=jnp.float32)

    attn = make_attention(wq, wk, wv)          # init-time weight prep (hoisted)
    out = jax.block_until_ready(attn(x))

    ref = attention_ref(x, wq, wk, wv)
    assert out.shape == (B, OUT_SIZE, S)
    # Exact softmax divide + f32 MXU matmuls: typical agreement ~1e-5; assert at 1e-3.
    max_err = float(jnp.max(jnp.abs(out - ref)))
    assert jnp.allclose(out, ref, atol=1e-3, rtol=1e-3), f"max abs err {max_err}"

    print("KERNEL_OK")
</pallas_src>

<mosaic_0001>
module attributes {stable_mosaic.version = 11 : i64} {
  func.func @_attention_kernel(%arg0: memref<16x32xf32, #tpu.memory_space<vmem>>, %arg1: memref<32x32xf32, #tpu.memory_space<vmem>>, %arg2: memref<32x32xf32, #tpu.memory_space<vmem>>, %arg3: memref<32x32xf32, #tpu.memory_space<vmem>>, %arg4: memref<2x32x8xf32, #tpu.memory_space<vmem>>) attributes {dimension_semantics = [], scalar_prefetch = 0 : i64, scratch_operands = 0 : i64, tpu.core_type = #tpu.core_type<tc>} {
    %c0 = arith.constant 0 : index
    %c0_0 = arith.constant 0 : index
    %0 = vector.load %arg0[%c0, %c0_0] : memref<16x32xf32, #tpu.memory_space<vmem>>, vector<16x32xf32>
    %c0_1 = arith.constant 0 : index
    %c0_2 = arith.constant 0 : index
    %1 = vector.load %arg1[%c0_1, %c0_2] : memref<32x32xf32, #tpu.memory_space<vmem>>, vector<32x32xf32>
    %c0_3 = arith.constant 0 : index
    %c0_4 = arith.constant 0 : index
    %2 = vector.load %arg2[%c0_3, %c0_4] : memref<32x32xf32, #tpu.memory_space<vmem>>, vector<32x32xf32>
    %c0_5 = arith.constant 0 : index
    %c0_6 = arith.constant 0 : index
    %3 = vector.load %arg3[%c0_5, %c0_6] : memref<32x32xf32, #tpu.memory_space<vmem>>, vector<32x32xf32>
    %cst = arith.constant dense<0.000000e+00> : vector<16x32xf32>
    %4 = tpu.matmul %0, %1, %cst {dimension_numbers = #tpu.dot_dimension_numbers<[1], [0], [0], [1], [0, 0, 1, 1], [], []>} : vector<16x32xf32>, vector<32x32xf32>, vector<16x32xf32> -> vector<16x32xf32>
    %cst_7 = arith.constant dense<0.000000e+00> : vector<16x32xf32>
    %5 = tpu.matmul %0, %2, %cst_7 {dimension_numbers = #tpu.dot_dimension_numbers<[1], [0], [0], [1], [0, 0, 1, 1], [], []>} : vector<16x32xf32>, vector<32x32xf32>, vector<16x32xf32> -> vector<16x32xf32>
    %6 = vector.extract_strided_slice %0 {offsets = [0, 0], sizes = [8, 32], strides = [1, 1]} : vector<16x32xf32> to vector<8x32xf32>
    %7 = vector.extract_strided_slice %4 {offsets = [0, 0], sizes = [8, 32], strides = [1, 1]} : vector<16x32xf32> to vector<8x32xf32>
    %8 = vector.extract_strided_slice %5 {offsets = [0, 0], sizes = [8, 32], strides = [1, 1]} : vector<16x32xf32> to vector<8x32xf32>
    %cst_8 = arith.constant dense<0.000000e+00> : vector<32x8xf32>
    %9 = tpu.matmul %3, %6, %cst_8 {dimension_numbers = #tpu.dot_dimension_numbers<[1], [1], [0], [0], [0, 0, 1, 0], [], []>} : vector<32x32xf32>, vector<8x32xf32>, vector<32x8xf32> -> vector<32x8xf32>
    %cst_9 = arith.constant dense<0.000000e+00> : vector<32x32xf32>
    %10 = tpu.matmul %8, %7, %cst_9 {dimension_numbers = #tpu.dot_dimension_numbers<[0], [0], [1], [1], [0, 1, 1, 1], [], []>} : vector<8x32xf32>, vector<8x32xf32>, vector<32x32xf32> -> vector<32x32xf32>
    %cst_10 = arith.constant dense<0xFF800000> : vector<32xf32>
    %11 = vector.multi_reduction <maximumf>, %10, %cst_10 [1] : vector<32x32xf32> to vector<32xf32>
    %12 = vector.shape_cast %11 : vector<32xf32> to vector<32x1xf32>
    %13 = vector.broadcast %12 : vector<32x1xf32> to vector<32x32xf32>
    %14 = arith.subf %10, %13 : vector<32x32xf32>
    %15 = math.exp %14 : vector<32x32xf32>
    %cst_11 = arith.constant dense<0.000000e+00> : vector<32xf32>
    %16 = vector.multi_reduction <add>, %15, %cst_11 [1] : vector<32x32xf32> to vector<32xf32>
    %17 = vector.shape_cast %16 : vector<32xf32> to vector<32x1xf32>
    %18 = vector.broadcast %17 : vector<32x1xf32> to vector<32x32xf32>
    %19 = arith.divf %15, %18 : vector<32x32xf32>
    %cst_12 = arith.constant dense<0.000000e+00> : vector<32x8xf32>
    %20 = tpu.matmul %19, %9, %cst_12 {dimension_numbers = #tpu.dot_dimension_numbers<[0], [0], [1], [1], [0, 1, 1, 1], [], []>} : vector<32x32xf32>, vector<32x8xf32>, vector<32x8xf32> -> vector<32x8xf32>
    %c0_13 = arith.constant 0 : index
    %c0_14 = arith.constant 0 : index
    %c0_15 = arith.constant 0 : index
    %21 = vector.load %arg4[%c0_13, %c0_14, %c0_15] : memref<2x32x8xf32, #tpu.memory_space<vmem>>, vector<1x32x8xf32>
    %22 = vector.shape_cast %21 : vector<1x32x8xf32> to vector<32x8xf32>
    %23 = vector.shape_cast %20 : vector<32x8xf32> to vector<1x32x8xf32>
    tpu.vector_store %arg4[%c0_13, %c0_14, %c0_15], %23 {strides = array<i32>} : memref<2x32x8xf32, #tpu.memory_space<vmem>>, vector<1x32x8xf32>,
    %24 = vector.extract_strided_slice %0 {offsets = [8, 0], sizes = [8, 32], strides = [1, 1]} : vector<16x32xf32> to vector<8x32xf32>
    %25 = vector.extract_strided_slice %4 {offsets = [8, 0], sizes = [8, 32], strides = [1, 1]} : vector<16x32xf32> to vector<8x32xf32>
    %26 = vector.extract_strided_slice %5 {offsets = [8, 0], sizes = [8, 32], strides = [1, 1]} : vector<16x32xf32> to vector<8x32xf32>
    %cst_16 = arith.constant dense<0.000000e+00> : vector<32x8xf32>
    %27 = tpu.matmul %3, %24, %cst_16 {dimension_numbers = #tpu.dot_dimension_numbers<[1], [1], [0], [0], [0, 0, 1, 0], [], []>} : vector<32x32xf32>, vector<8x32xf32>, vector<32x8xf32> -> vector<32x8xf32>
    %cst_17 = arith.constant dense<0.000000e+00> : vector<32x32xf32>
    %28 = tpu.matmul %26, %25, %cst_17 {dimension_numbers = #tpu.dot_dimension_numbers<[0], [0], [1], [1], [0, 1, 1, 1], [], []>} : vector<8x32xf32>, vector<8x32xf32>, vector<32x32xf32> -> vector<32x32xf32>
    %cst_18 = arith.constant dense<0xFF800000> : vector<32xf32>
    %29 = vector.multi_reduction <maximumf>, %28, %cst_18 [1] : vector<32x32xf32> to vector<32xf32>
    %30 = vector.shape_cast %29 : vector<32xf32> to vector<32x1xf32>
    %31 = vector.broadcast %30 : vector<32x1xf32> to vector<32x32xf32>
    %32 = arith.subf %28, %31 : vector<32x32xf32>
    %33 = math.exp %32 : vector<32x32xf32>
    %cst_19 = arith.constant dense<0.000000e+00> : vector<32xf32>
    %34 = vector.multi_reduction <add>, %33, %cst_19 [1] : vector<32x32xf32> to vector<32xf32>
    %35 = vector.shape_cast %34 : vector<32xf32> to vector<32x1xf32>
    %36 = vector.broadcast %35 : vector<32x1xf32> to vector<32x32xf32>
    %37 = arith.divf %33, %36 : vector<32x32xf32>
    %cst_20 = arith.constant dense<0.000000e+00> : vector<32x8xf32>
    %38 = tpu.matmul %37, %27, %cst_20 {dimension_numbers = #tpu.dot_dimension_numbers<[0], [0], [1], [1], [0, 1, 1, 1], [], []>} : vector<32x32xf32>, vector<32x8xf32>, vector<32x8xf32> -> vector<32x8xf32>
    %c1 = arith.constant 1 : index
    %c0_21 = arith.constant 0 : index
    %c0_22 = arith.constant 0 : index
    %39 = vector.load %arg4[%c1, %c0_21, %c0_22] : memref<2x32x8xf32, #tpu.memory_space<vmem>>, vector<1x32x8xf32>
    %40 = vector.shape_cast %39 : vector<1x32x8xf32> to vector<32x8xf32>
    %41 = vector.shape_cast %38 : vector<32x8xf32> to vector<1x32x8xf32>
    tpu.vector_store %arg4[%c1, %c0_21, %c0_22], %41 {strides = array<i32>} : memref<2x32x8xf32, #tpu.memory_space<vmem>>, vector<1x32x8xf32>,
    return
  }
}

</mosaic_0001>

<llo_original>
// kernel: attention.1
$region0: #{attention.1}
  #allocation0 [shape = 'u32[]', space=smem, size = 0x4, offset = 0x4, fixed_abs, tag = 'smem constant byte address 0x4 - core index']
  #allocation1 [shape = 'u32[144,128]{1,0:T(1,128)}', space=vmem, size = 0x12000, scoped, tag = 'internal scratch']
  %s0 = inlined_call_operand.hbm [shape: f32[16,32], index: 0, kind: input, shape index: {}]
  %s1 = inlined_call_operand.hbm [shape: f32[32,32], index: 1, kind: input, shape index: {}]
  %s2 = inlined_call_operand.hbm [shape: f32[32,32], index: 2, kind: input, shape index: {}]
  %s3 = inlined_call_operand.hbm [shape: f32[32,32], index: 3, kind: input, shape index: {}]
  %s4 = inlined_call_operand.vmem [shape: f32[2,32,8], index: 4, kind: output, shape index: {}]
  %s5 = sld [smem:[#allocation0]]
  $region42: #{attention.1} parent=0
    _
  %s7 = ssub.s32 1, %s5
  %s8 = scalar_select 0, %s7, %s5
  $region1: #{attention.1} parent=0
    #allocation2 [shape = 'u8[8192]{0}', space=vmem, size = 0x2000, scoped, tag = 'input window, operand 0, single buffered']
    #allocation3 [shape = 's32[1]{0}', space=sflag, size = 0x4, scoped, tag = 'scoped memory for attention.1']
    #allocation4 [shape = 'u8[16384]{0}', space=vmem, size = 0x4000, scoped, tag = 'input window, operand 1, single buffered']
    #allocation5 [shape = 's32[1]{0}', space=sflag, size = 0x4, scoped, tag = 'scoped memory for attention.1']
    #allocation6 [shape = 'u8[16384]{0}', space=vmem, size = 0x4000, scoped, tag = 'input window, operand 2, single buffered']
    #allocation7 [shape = 'u8[16384]{0}', space=vmem, size = 0x4000, scoped, tag = 'input window, operand 3, single buffered']
    #allocation8 [shape = 's32[1]{0}', space=sflag, size = 0x4, scoped, tag = 'scoped memory for attention.1']
    %9 = vsyncpa [#allocation3], 0
    %10 = vsyncpa [#allocation5], 0
    %11 = vsyncpa [#allocation8], 0
    // Predicated region
    $region2: #{attention.1} parent=1 // pred_check
      _
    $region3: #{attention.1} parent=1 // pred_check_branch
      %13 = sbr.rel (0) target = $region5
    $region4: #{attention.1} parent=1 // pred_region
      %s15 = ssub.s32 256, 256
      %16 = vsyncadd [#allocation3], %s15
      %s17 = sshll.u32 [#allocation2], 4
      %s18 = int_to_ptr.vmem [resolvable:$true] %s17
      %23 = dma.hbm_to_vmem [thread:$0]  %s0, 256, %s18, [#allocation3], 128, 128, 8
    $region5: #{attention.1} parent=1 // pred_fallthru
      _
    // Predicated region
    $region6: #{attention.1} parent=1 // pred_check
      _
    $region7: #{attention.1} parent=1 // pred_check_branch
      %25 = sbr.rel (0) target = $region9
    $region8: #{attention.1} parent=1 // pred_region
      %s27 = ssub.s32 512, 512
      %28 = vsyncadd [#allocation5], %s27
      %s29 = sshll.u32 [#allocation4], 4
      %s30 = int_to_ptr.vmem [resolvable:$true] %s29
      %35 = dma.hbm_to_vmem [thread:$0]  %s1, 512, %s30, [#allocation5], 128, 128, 8
    $region9: #{attention.1} parent=1 // pred_fallthru
      _
    // Predicated region
    $region10: #{attention.1} parent=1 // pred_check
      _
    $region11: #{attention.1} parent=1 // pred_check_branch
      %37 = sbr.rel (0) target = $region13
    $region12: #{attention.1} parent=1 // pred_region
      %s39 = ssub.s32 512, 512
      %40 = vsyncadd [#allocation5], %s39
      %s41 = sshll.u32 [#allocation6], 4
      %s42 = int_to_ptr.vmem [resolvable:$true] %s41
      %47 = dma.hbm_to_vmem [thread:$0]  %s2, 512, %s42, [#allocation5], 128, 128, 8
    $region13: #{attention.1} parent=1 // pred_fallthru
      _
    // Predicated region
    $region14: #{attention.1} parent=1 // pred_check
      _
    $region15: #{attention.1} parent=1 // pred_check_branch
      %49 = sbr.rel (0) target = $region17
    $region16: #{attention.1} parent=1 // pred_region
      %s51 = ssub.s32 512, 512
      %52 = vsyncadd [#allocation8], %s51
      %s53 = sshll.u32 [#allocation7], 4
      %s54 = int_to_ptr.vmem [resolvable:$true] %s53
      %59 = dma.hbm_to_vmem [thread:$0]  %s3, 512, %s54, [#allocation8], 128, 128, 8
    $region17: #{attention.1} parent=1 // pred_fallthru
      _
    // Predicated region
    $region18: #{attention.1} parent=1 // pred_check
      _
    $region19: #{attention.1} parent=1 // pred_check_branch
      %61 = sbr.rel (0) target = $region21
    $region20: #{attention.1} parent=1 // pred_region
      %62 = dma.done [#allocation3], 256
    $region21: #{attention.1} parent=1 // pred_fallthru
      _
    // Predicated region
    $region22: #{attention.1} parent=1 // pred_check
      _
    $region23: #{attention.1} parent=1 // pred_check_branch
      %64 = sbr.rel (0) target = $region25
    $region24: #{attention.1} parent=1 // pred_region
      %65 = dma.done [#allocation5], 512
    $region25: #{attention.1} parent=1 // pred_fallthru
      _
    // Predicated region
    $region26: #{attention.1} parent=1 // pred_check
      _
    $region27: #{attention.1} parent=1 // pred_check_branch
      %67 = sbr.rel (0) target = $region29
    $region28: #{attention.1} parent=1 // pred_region
      %68 = dma.done [#allocation5], 512
    $region29: #{attention.1} parent=1 // pred_fallthru
      _
    // Predicated region
    $region30: #{attention.1} parent=1 // pred_check
      _
    $region31: #{attention.1} parent=1 // pred_check_branch
      %70 = sbr.rel (0) target = $region33
    $region32: #{attention.1} parent=1 // pred_region
      %71 = dma.done [#allocation8], 512
    $region33: #{attention.1} parent=1 // pred_fallthru
      _
    %v72 = vld [vmem:[#allocation2] sm:$0xff]
    %v73 = vld [vmem:[#allocation2 + $0x8] sm:$0xff]
    %v74 = vld [vmem:[#allocation4] sm:$0xff]
    %v75 = vld [vmem:[#allocation4 + $0x8] sm:$0xff]
    %v76 = vld [vmem:[#allocation4 + $0x10] sm:$0xff]
    %v77 = vld [vmem:[#allocation4 + $0x18] sm:$0xff]
    %v78 = vld [vmem:[#allocation6] sm:$0xff]
    %v79 = vld [vmem:[#allocation6 + $0x8] sm:$0xff]
    %v80 = vld [vmem:[#allocation6 + $0x10] sm:$0xff]
    %v81 = vld [vmem:[#allocation6 + $0x18] sm:$0xff]
    %v82 = vld [vmem:[#allocation7] sm:$0xff]
    %v83 = vld [vmem:[#allocation7 + $0x8] sm:$0xff]
    %v84 = vld [vmem:[#allocation7 + $0x10] sm:$0xff]
    %v85 = vld [vmem:[#allocation7 + $0x18] sm:$0xff]
    %vm86 = vcmask 261120
    %v88 = vsel %vm86, %v72, 0
    %v91 = vsel %vm86, %v73, 0
    %93 = vmatprep.subr.mxu0 0.0
    %94 = vmatpush1.msra.mxu0 0.0
    %95 = vmatprep.subr.mxu0 0.0
    %96 = vmatpush1.msra.mxu0 0.0
    %97 = vmatprep.subr.mxu0 0.0
    %98 = vmatpush1.msra.mxu0 0.0
    %99 = vmatprep.subr.mxu0 0.0
    %100 = vmatpush1.msra.mxu0 0.0
    %101 = vmatprep.subr.mxu0 0.0
    %102 = vmatpush1.msra.mxu0 0.0
    %103 = vmatprep.subr.mxu0 0.0
    %104 = vmatpush1.msra.mxu0 0.0
    %105 = vmatprep.subr.mxu0 0.0
    %106 = vmatpush1.msra.mxu0 0.0
    %107 = vmatprep.subr.mxu0 0.0
    %108 = vmatpush1.msra.mxu0 0.0
    %109 = vmatprep.subr.mxu0 0.0
    %110 = vmatpush1.msra.mxu0 0.0
    %111 = vmatprep.subr.mxu0 0.0
    %112 = vmatpush1.msra.mxu0 0.0
    %113 = vmatprep.subr.mxu0 0.0
    %114 = vmatpush1.msra.mxu0 0.0
    %115 = vmatprep.subr.mxu0 0.0
    %116 = vmatpush1.msra.mxu0 0.0
    %117 = vmatprep.subr.mxu0 0.0
    %118 = vmatpush1.msra.mxu0 %v77
    %119 = vmatprep.subr.mxu0 0.0
    %120 = vmatpush1.msra.mxu0 %v76
    %121 = vmatprep.subr.mxu0 0.0
    %122 = vmatpush1.msra.mxu0 %v75
    %123 = vmatprep.subr.mxu0 0.0
    %124 = vmatpush1.msra.mxu0 %v74
    %125 = vmatprep.subr.mxu0 0.0
    %126 = vmatpush2.msra.mxu0 0.0
    %127 = vmatprep.subr.mxu0 0.0
    %128 = vmatpush2.msra.mxu0 0.0
    %129 = vmatprep.subr.mxu0 0.0
    %130 = vmatpush2.msra.mxu0 0.0
    %131 = vmatprep.subr.mxu0 0.0
    %132 = vmatpush2.msra.mxu0 0.0
    %133 = vmatprep.subr.mxu0 0.0
    %134 = vmatpush2.msra.mxu0 0.0
    %135 = vmatprep.subr.mxu0 0.0
    %136 = vmatpush2.msra.mxu0 0.0
    %137 = vmatprep.subr.mxu0 0.0
    %138 = vmatpush2.msra.mxu0 0.0
    %139 = vmatprep.subr.mxu0 0.0
    %140 = vmatpush2.msra.mxu0 0.0
    %141 = vmatprep.subr.mxu0 0.0
    %142 = vmatpush2.msra.mxu0 0.0
    %143 = vmatprep.subr.mxu0 0.0
    %144 = vmatpush2.msra.mxu0 0.0
    %145 = vmatprep.subr.mxu0 0.0
    %146 = vmatpush2.msra.mxu0 0.0
    %147 = vmatprep.subr.mxu0 0.0
    %148 = vmatpush2.msra.mxu0 0.0
    %149 = vmatprep.subr.mxu0 0.0
    %150 = vmatpush2.msra.mxu0 0.0
    %151 = vmatprep.subr.mxu0 0.0
    %152 = vmatpush2.msra.mxu0 0.0
    %153 = vmatprep.subr.mxu0 0.0
    %154 = vmatpush2.msra.mxu0 0.0
    %155 = vmatprep.subr.mxu0 0.0
    %156 = vmatpush2.msra.mxu0 0.0
    %157 = vmatprep.mubr.f32.mxu0 0.0
    %158 = vmatmul.mubr.f32.gmra.mxu0 %v88
    %v159 = vpop.f32.mrf.mxu0
    %v160 = vadd.f32 0.0, %v159
    %v161 = vpop.f32.mrf.mxu0
    %162 = vmatprep.mubr.f32.mxu0 0.0
    %163 = vmatmul.mubr.f32.gmra.mxu0 %v91
    %v164 = vpop.f32.mrf.mxu0
    %v165 = vadd.f32 0.0, %v164
    %v166 = vpop.f32.mrf.mxu0
    %167 = vdwg.mxu0
    %168 = vmatprep.subr.mxu0 0.0
    %169 = vmatpush1.msra.mxu0 0.0
    %170 = vmatprep.subr.mxu0 0.0
    %171 = vmatpush1.msra.mxu0 0.0
    %172 = vmatprep.subr.mxu0 0.0
    %173 = vmatpush1.msra.mxu0 0.0
    %174 = vmatprep.subr.mxu0 0.0
    %175 = vmatpush1.msra.mxu0 0.0
    %176 = vmatprep.subr.mxu0 0.0
    %177 = vmatpush1.msra.mxu0 0.0
    %178 = vmatprep.subr.mxu0 0.0
    %179 = vmatpush1.msra.mxu0 0.0
    %180 = vmatprep.subr.mxu0 0.0
    %181 = vmatpush1.msra.mxu0 0.0
    %182 = vmatprep.subr.mxu0 0.0
    %183 = vmatpush1.msra.mxu0 0.0
    %184 = vmatprep.subr.mxu0 0.0
    %185 = vmatpush1.msra.mxu0 0.0
    %186 = vmatprep.subr.mxu0 0.0
    %187 = vmatpush1.msra.mxu0 0.0
    %188 = vmatprep.subr.mxu0 0.0
    %189 = vmatpush1.msra.mxu0 0.0
    %190 = vmatprep.subr.mxu0 0.0
    %191 = vmatpush1.msra.mxu0 0.0
    %192 = vmatprep.subr.mxu0 0.0
    %193 = vmatpush1.msra.mxu0 %v81
    %194 = vmatprep.subr.mxu0 0.0
    %195 = vmatpush1.msra.mxu0 %v80
    %196 = vmatprep.subr.mxu0 0.0
    %197 = vmatpush1.msra.mxu0 %v79
    %198 = vmatprep.subr.mxu0 0.0
    %199 = vmatpush1.msra.mxu0 %v78
    %200 = vmatprep.subr.mxu0 0.0
    %201 = vmatpush2.msra.mxu0 0.0
    %202 = vmatprep.subr.mxu0 0.0
    %203 = vmatpush2.msra.mxu0 0.0
    %204 = vmatprep.subr.mxu0 0.0
    %205 = vmatpush2.msra.mxu0 0.0
    %206 = vmatprep.subr.mxu0 0.0
    %207 = vmatpush2.msra.mxu0 0.0
    %208 = vmatprep.subr.mxu0 0.0
    %209 = vmatpush2.msra.mxu0 0.0
    %210 = vmatprep.subr.mxu0 0.0
    %211 = vmatpush2.msra.mxu0 0.0
    %212 = vmatprep.subr.mxu0 0.0
    %213 = vmatpush2.msra.mxu0 0.0
    %214 = vmatprep.subr.mxu0 0.0
    %215 = vmatpush2.msra.mxu0 0.0
    %216 = vmatprep.subr.mxu0 0.0
    %217 = vmatpush2.msra.mxu0 0.0
    %218 = vmatprep.subr.mxu0 0.0
    %219 = vmatpush2.msra.mxu0 0.0
    %220 = vmatprep.subr.mxu0 0.0
    %221 = vmatpush2.msra.mxu0 0.0
    %222 = vmatprep.subr.mxu0 0.0
    %223 = vmatpush2.msra.mxu0 0.0
    %224 = vmatprep.subr.mxu0 0.0
    %225 = vmatpush2.msra.mxu0 0.0
    %226 = vmatprep.subr.mxu0 0.0
    %227 = vmatpush2.msra.mxu0 0.0
    %228 = vmatprep.subr.mxu0 0.0
    %229 = vmatpush2.msra.mxu0 0.0
    %230 = vmatprep.subr.mxu0 0.0
    %231 = vmatpush2.msra.mxu0 0.0
    %232 = vmatprep.mubr.f32.mxu0 0.0
    %233 = vmatmul.mubr.f32.gmra.mxu0 %v88
    %v234 = vpop.f32.mrf.mxu0
    %v235 = vadd.f32 0.0, %v234
    %v236 = vpop.f32.mrf.mxu0
    %237 = vmatprep.mubr.f32.mxu0 0.0
    %238 = vmatmul.mubr.f32.gmra.mxu0 %v91
    %v239 = vpop.f32.mrf.mxu0
    %v240 = vadd.f32 0.0, %v239
    %v241 = vpop.f32.mrf.mxu0
    %242 = vdwg.mxu0
    %v244 = vsel %vm86, %v82, 0
    %v247 = vsel %vm86, %v83, 0
    %v250 = vsel %vm86, %v84, 0
    %v253 = vsel %vm86, %v85, 0
    %255 = vmatprep.subr.mxu0 0.0
    %256 = vmatpush1.xpose.msra.mxu0 0.0
    %257 = vmatprep.subr.mxu0 0.0
    %258 = vmatpush1.xpose.msra.mxu0 0.0
    %259 = vmatprep.subr.mxu0 0.0
    %260 = vmatpush1.xpose.msra.mxu0 0.0
    %261 = vmatprep.subr.mxu0 0.0
    %262 = vmatpush1.xpose.msra.mxu0 0.0
    %263 = vmatprep.subr.mxu0 0.0
    %264 = vmatpush1.xpose.msra.mxu0 0.0
    %265 = vmatprep.subr.mxu0 0.0
    %266 = vmatpush1.xpose.msra.mxu0 0.0
    %267 = vmatprep.subr.mxu0 0.0
    %268 = vmatpush1.xpose.msra.mxu0 0.0
    %269 = vmatprep.subr.mxu0 0.0
    %270 = vmatpush1.xpose.msra.mxu0 0.0
    %271 = vmatprep.subr.mxu0 0.0
    %272 = vmatpush1.xpose.msra.mxu0 0.0
    %273 = vmatprep.subr.mxu0 0.0
    %274 = vmatpush1.xpose.msra.mxu0 0.0
    %275 = vmatprep.subr.mxu0 0.0
    %276 = vmatpush1.xpose.msra.mxu0 0.0
    %277 = vmatprep.subr.mxu0 0.0
    %278 = vmatpush1.xpose.msra.mxu0 0.0
    %279 = vmatprep.subr.mxu0 0.0
    %280 = vmatpush1.xpose.msra.mxu0 0.0
    %281 = vmatprep.subr.mxu0 0.0
    %282 = vmatpush1.xpose.msra.mxu0 0.0
    %283 = vmatprep.subr.mxu0 0.0
    %284 = vmatpush1.xpose.msra.mxu0 0.0
    %285 = vmatprep.subr.mxu0 0.0
    %286 = vmatpush1.xpose.msra.mxu0 %v88
    %287 = vmatprep.subr.mxu0 0.0
    %288 = vmatpush2.xpose.msra.mxu0 0.0
    %289 = vmatprep.subr.mxu0 0.0
    %290 = vmatpush2.xpose.msra.mxu0 0.0
    %291 = vmatprep.subr.mxu0 0.0
    %292 = vmatpush2.xpose.msra.mxu0 0.0
    %293 = vmatprep.subr.mxu0 0.0
    %294 = vmatpush2.xpose.msra.mxu0 0.0
    %295 = vmatprep.subr.mxu0 0.0
    %296 = vmatpush2.xpose.msra.mxu0 0.0
    %297 = vmatprep.subr.mxu0 0.0
    %298 = vmatpush2.xpose.msra.mxu0 0.0
    %299 = vmatprep.subr.mxu0 0.0
    %300 = vmatpush2.xpose.msra.mxu0 0.0
    %301 = vmatprep.subr.mxu0 0.0
    %302 = vmatpush2.xpose.msra.mxu0 0.0
    %303 = vmatprep.subr.mxu0 0.0
    %304 = vmatpush2.xpose.msra.mxu0 0.0
    %305 = vmatprep.subr.mxu0 0.0
    %306 = vmatpush2.xpose.msra.mxu0 0.0
    %307 = vmatprep.subr.mxu0 0.0
    %308 = vmatpush2.xpose.msra.mxu0 0.0
    %309 = vmatprep.subr.mxu0 0.0
    %310 = vmatpush2.xpose.msra.mxu0 0.0
    %311 = vmatprep.subr.mxu0 0.0
    %312 = vmatpush2.xpose.msra.mxu0 0.0
    %313 = vmatprep.subr.mxu0 0.0
    %314 = vmatpush2.xpose.msra.mxu0 0.0
    %315 = vmatprep.subr.mxu0 0.0
    %316 = vmatpush2.xpose.msra.mxu0 0.0
    %317 = vmatprep.subr.mxu0 0.0
    %318 = vmatpush2.xpose.msra.mxu0 0.0
    %319 = vmatprep.mubr.f32.mxu0 0.0
    %320 = vmatmul.mubr.f32.gmra.mxu0 %v244
    %v321 = vpop.f32.mrf.mxu0
    %v322 = vadd.f32 0.0, %v321
    %v323 = vpop.f32.mrf.mxu0
    %324 = vmatprep.mubr.f32.mxu0 0.0
    %325 = vmatmul.mubr.f32.gmra.mxu0 %v247
    %v326 = vpop.f32.mrf.mxu0
    %v327 = vadd.f32 0.0, %v326
    %v328 = vpop.f32.mrf.mxu0
    %329 = vmatprep.mubr.f32.mxu0 0.0
    %330 = vmatmul.mubr.f32.gmra.mxu0 %v250
    %v331 = vpop.f32.mrf.mxu0
    %v332 = vadd.f32 0.0, %v331
    %v333 = vpop.f32.mrf.mxu0
    %334 = vmatprep.mubr.f32.mxu0 0.0
    %335 = vmatmul.mubr.f32.gmra.mxu0 %v253
    %v336 = vpop.f32.mrf.mxu0
    %v337 = vadd.f32 0.0, %v336
    %v338 = vpop.f32.mrf.mxu0
    %339 = vdwg.mxu0
    %340 = vxpose.xlu0.b32.start [1/16] %v235, 128
    %341 = vxpose.xlu0.b32.cont [2/16] 0.0, 128
    %342 = vxpose.xlu0.b32.cont [3/16] 0.0, 128
    %343 = vxpose.xlu0.b32.cont [4/16] 0.0, 128
    %344 = vxpose.xlu0.b32.cont [5/16] 0.0, 128
    %345 = vxpose.xlu0.b32.cont [6/16] 0.0, 128
    %346 = vxpose.xlu0.b32.cont [7/16] 0.0, 128
    %347 = vxpose.xlu0.b32.cont [8/16] 0.0, 128
    %348 = vxpose.xlu0.b32.cont [9/16] 0.0, 128
    %349 = vxpose.xlu0.b32.cont [10/16] 0.0, 128
    %350 = vxpose.xlu0.b32.cont [11/16] 0.0, 128
    %351 = vxpose.xlu0.b32.cont [12/16] 0.0, 128
    %352 = vxpose.xlu0.b32.cont [13/16] 0.0, 128
    %353 = vxpose.xlu0.b32.cont [14/16] 0.0, 128
    %354 = vxpose.xlu0.b32.cont [15/16] 0.0, 128
    %355 = vxpose.xlu0.b32.end [16/16] 0.0, 128
    %v356 = vpop.trf.xlu0
    %v357 = vpop.trf.xlu0
    %v358 = vpop.trf.xlu0
    %v359 = vpop.trf.xlu0
    %v360 = vpop.trf.xlu0
    %v361 = vpop.trf.xlu0
    %v362 = vpop.trf.xlu0
    %v363 = vpop.trf.xlu0
    %v364 = vpop.trf.xlu0
    %v365 = vpop.trf.xlu0
    %v366 = vpop.trf.xlu0
    %v367 = vpop.trf.xlu0
    %v368 = vpop.trf.xlu0
    %v369 = vpop.trf.xlu0
    %v370 = vpop.trf.xlu0
    %v371 = vpop.trf.xlu0
    %vm372 = vcmask 64512
    %v374 = vsel %vm372, %v356, 0
    %v377 = vsel %vm372, %v357, 0
    %v380 = vsel %vm372, %v358, 0
    %v383 = vsel %vm372, %v359, 0
    %385 = vmatprep.subr.mxu0 0.0
    %386 = vmatpush1.msra.mxu0 0.0
    %387 = vmatprep.subr.mxu0 0.0
    %388 = vmatpush1.msra.mxu0 0.0
    %389 = vmatprep.subr.mxu0 0.0
    %390 = vmatpush1.msra.mxu0 0.0
    %391 = vmatprep.subr.mxu0 0.0
    %392 = vmatpush1.msra.mxu0 0.0
    %393 = vmatprep.subr.mxu0 0.0
    %394 = vmatpush1.msra.mxu0 0.0
    %395 = vmatprep.subr.mxu0 0.0
    %396 = vmatpush1.msra.mxu0 0.0
    %397 = vmatprep.subr.mxu0 0.0
    %398 = vmatpush1.msra.mxu0 0.0
    %399 = vmatprep.subr.mxu0 0.0
    %400 = vmatpush1.msra.mxu0 0.0
    %401 = vmatprep.subr.mxu0 0.0
    %402 = vmatpush1.msra.mxu0 0.0
    %403 = vmatprep.subr.mxu0 0.0
    %404 = vmatpush1.msra.mxu0 0.0
    %405 = vmatprep.subr.mxu0 0.0
    %406 = vmatpush1.msra.mxu0 0.0
    %407 = vmatprep.subr.mxu0 0.0
    %408 = vmatpush1.msra.mxu0 0.0
    %409 = vmatprep.subr.mxu0 0.0
    %410 = vmatpush1.msra.mxu0 0.0
    %411 = vmatprep.subr.mxu0 0.0
    %412 = vmatpush1.msra.mxu0 0.0
    %413 = vmatprep.subr.mxu0 0.0
    %414 = vmatpush1.msra.mxu0 0.0
    %415 = vmatprep.subr.mxu0 0.0
    %416 = vmatpush1.msra.mxu0 %v160
    %417 = vmatprep.subr.mxu0 0.0
    %418 = vmatpush2.msra.mxu0 0.0
    %419 = vmatprep.subr.mxu0 0.0
    %420 = vmatpush2.msra.mxu0 0.0
    %421 = vmatprep.subr.mxu0 0.0
    %422 = vmatpush2.msra.mxu0 0.0
    %423 = vmatprep.subr.mxu0 0.0
    %424 = vmatpush2.msra.mxu0 0.0
    %425 = vmatprep.subr.mxu0 0.0
    %426 = vmatpush2.msra.mxu0 0.0
    %427 = vmatprep.subr.mxu0 0.0
    %428 = vmatpush2.msra.mxu0 0.0
    %429 = vmatprep.subr.mxu0 0.0
    %430 = vmatpush2.msra.mxu0 0.0
    %431 = vmatprep.subr.mxu0 0.0
    %432 = vmatpush2.msra.mxu0 0.0
    %433 = vmatprep.subr.mxu0 0.0
    %434 = vmatpush2.msra.mxu0 0.0
    %435 = vmatprep.subr.mxu0 0.0
    %436 = vmatpush2.msra.mxu0 0.0
    %437 = vmatprep.subr.mxu0 0.0
    %438 = vmatpush2.msra.mxu0 0.0
    %439 = vmatprep.subr.mxu0 0.0
    %440 = vmatpush2.msra.mxu0 0.0
    %441 = vmatprep.subr.mxu0 0.0
    %442 = vmatpush2.msra.mxu0 0.0
    %443 = vmatprep.subr.mxu0 0.0
    %444 = vmatpush2.msra.mxu0 0.0
    %445 = vmatprep.subr.mxu0 0.0
    %446 = vmatpush2.msra.mxu0 0.0
    %447 = vmatprep.subr.mxu0 0.0
    %448 = vmatpush2.msra.mxu0 0.0
    %449 = vmatprep.mubr.f32.mxu0 0.0
    %450 = vmatmul.mubr.f32.gmra.mxu0 %v374
    %v451 = vpop.f32.mrf.mxu0
    %v452 = vadd.f32 0.0, %v451
    %v453 = vpop.f32.mrf.mxu0
    %454 = vmatprep.mubr.f32.mxu0 0.0
    %455 = vmatmul.mubr.f32.gmra.mxu0 %v377
    %v456 = vpop.f32.mrf.mxu0
    %v457 = vadd.f32 0.0, %v456
    %v458 = vpop.f32.mrf.mxu0
    %459 = vmatprep.mubr.f32.mxu0 0.0
    %460 = vmatmul.mubr.f32.gmra.mxu0 %v380
    %v461 = vpop.f32.mrf.mxu0
    %v462 = vadd.f32 0.0, %v461
    %v463 = vpop.f32.mrf.mxu0
    %464 = vmatprep.mubr.f32.mxu0 0.0
    %465 = vmatmul.mubr.f32.gmra.mxu0 %v383
    %v466 = vpop.f32.mrf.mxu0
    %v467 = vadd.f32 0.0, %v466
    %v468 = vpop.f32.mrf.mxu0
    %469 = vdwg.mxu0
    %v470 = vsel %vm86, %v452, -inf
    %471 = vmax.xlane.f32.xlu0 %v470
    %v472 = vpop.xlane.xlu0 %471
    %v473 = vsel %vm86, %v457, -inf
    %474 = vmax.xlane.f32.xlu0 %v473
    %v475 = vpop.xlane.xlu0 %474
    %v476 = vsel %vm86, %v462, -inf
    %477 = vmax.xlane.f32.xlu0 %v476
    %v478 = vpop.xlane.xlu0 %477
    %v479 = vsel %vm86, %v467, -inf
    %480 = vmax.xlane.f32.xlu0 %v479
    %v481 = vpop.xlane.xlu0 %480
    %v482 = vsub.f32 %v452, %v472
    %v483 = vsub.f32 %v457, %v475
    %v484 = vsub.f32 %v462, %v478
    %v485 = vsub.f32 %v467, %v481
    %v486 = vmul.f32 %v482, 1.442695
    %v487 = vpow.pop %v486
    %v488 = vmul.f32 %v483, 1.442695
    %v489 = vpow.pop %v488
    %v490 = vmul.f32 %v484, 1.442695
    %v491 = vpow.pop %v490
    %v492 = vmul.f32 %v485, 1.442695
    %v493 = vpow.pop %v492
    %v494 = vsel %vm86, %v487, 0.0
    %495 = vadd.xlane.f32.xlu0 %v494
    %v496 = vpop.xlane.xlu0 %495
    %v497 = vsel %vm86, %v489, 0.0
    %498 = vadd.xlane.f32.xlu0 %v497
    %v499 = vpop.xlane.xlu0 %498
    %v500 = vsel %vm86, %v491, 0.0
    %501 = vadd.xlane.f32.xlu0 %v500
    %v502 = vpop.xlane.xlu0 %501
    %v503 = vsel %vm86, %v493, 0.0
    %504 = vadd.xlane.f32.xlu0 %v503
    %v505 = vpop.xlane.xlu0 %504
    %v506 = vrcp.pop %v496
    %v507 = vmul.f32 %v487, %v506
    %v508 = vrcp.pop %v499
    %v509 = vmul.f32 %v489, %v508
    %v510 = vrcp.pop %v502
    %v511 = vmul.f32 %v491, %v510
    %v512 = vrcp.pop %v505
    %v513 = vmul.f32 %v493, %v512
    %514 = vxpose.xlu0.b32.start [1/16] %v507, 128
    %515 = vxpose.xlu0.b32.cont [2/16] %v509, 128
    %516 = vxpose.xlu0.b32.cont [3/16] %v511, 128
    %517 = vxpose.xlu0.b32.cont [4/16] %v513, 128
    %518 = vxpose.xlu0.b32.cont [5/16] 0.0, 128
    %519 = vxpose.xlu0.b32.cont [6/16] 0.0, 128
    %520 = vxpose.xlu0.b32.cont [7/16] 0.0, 128
    %521 = vxpose.xlu0.b32.cont [8/16] 0.0, 128
    %522 = vxpose.xlu0.b32.cont [9/16] 0.0, 128
    %523 = vxpose.xlu0.b32.cont [10/16] 0.0, 128
    %524 = vxpose.xlu0.b32.cont [11/16] 0.0, 128
    %525 = vxpose.xlu0.b32.cont [12/16] 0.0, 128
    %526 = vxpose.xlu0.b32.cont [13/16] 0.0, 128
    %527 = vxpose.xlu0.b32.cont [14/16] 0.0, 128
    %528 = vxpose.xlu0.b32.cont [15/16] 0.0, 128
    %529 = vxpose.xlu0.b32.end [16/16] 0.0, 128
    %v530 = vpop.trf.xlu0
    %v531 = vpop.trf.xlu0
    %v532 = vpop.trf.xlu0
    %v533 = vpop.trf.xlu0
    %v534 = vpop.trf.xlu0
    %v535 = vpop.trf.xlu0
    %v536 = vpop.trf.xlu0
    %v537 = vpop.trf.xlu0
    %v538 = vpop.trf.xlu0
    %v539 = vpop.trf.xlu0
    %v540 = vpop.trf.xlu0
    %v541 = vpop.trf.xlu0
    %v542 = vpop.trf.xlu0
    %v543 = vpop.trf.xlu0
    %v544 = vpop.trf.xlu0
    %v545 = vpop.trf.xlu0
    %v547 = vsel %vm86, %v530, 0
    %v550 = vsel %vm86, %v531, 0
    %v553 = vsel %vm86, %v532, 0
    %v556 = vsel %vm86, %v533, 0
    %558 = vmatprep.subr.mxu0 0.0
    %559 = vmatpush1.msra.mxu0 0.0
    %560 = vmatprep.subr.mxu0 0.0
    %561 = vmatpush1.msra.mxu0 0.0
    %562 = vmatprep.subr.mxu0 0.0
    %563 = vmatpush1.msra.mxu0 0.0
    %564 = vmatprep.subr.mxu0 0.0
    %565 = vmatpush1.msra.mxu0 0.0
    %566 = vmatprep.subr.mxu0 0.0
    %567 = vmatpush1.msra.mxu0 0.0
    %568 = vmatprep.subr.mxu0 0.0
    %569 = vmatpush1.msra.mxu0 0.0
    %570 = vmatprep.subr.mxu0 0.0
    %571 = vmatpush1.msra.mxu0 0.0
    %572 = vmatprep.subr.mxu0 0.0
    %573 = vmatpush1.msra.mxu0 0.0
    %574 = vmatprep.subr.mxu0 0.0
    %575 = vmatpush1.msra.mxu0 0.0
    %576 = vmatprep.subr.mxu0 0.0
    %577 = vmatpush1.msra.mxu0 0.0
    %578 = vmatprep.subr.mxu0 0.0
    %579 = vmatpush1.msra.mxu0 0.0
    %580 = vmatprep.subr.mxu0 0.0
    %581 = vmatpush1.msra.mxu0 0.0
    %582 = vmatprep.subr.mxu0 0.0
    %583 = vmatpush1.msra.mxu0 %v337
    %584 = vmatprep.subr.mxu0 0.0
    %585 = vmatpush1.msra.mxu0 %v332
    %586 = vmatprep.subr.mxu0 0.0
    %587 = vmatpush1.msra.mxu0 %v327
    %588 = vmatprep.subr.mxu0 0.0
    %589 = vmatpush1.msra.mxu0 %v322
    %590 = vmatprep.subr.mxu0 0.0
    %591 = vmatpush2.msra.mxu0 0.0
    %592 = vmatprep.subr.mxu0 0.0
    %593 = vmatpush2.msra.mxu0 0.0
    %594 = vmatprep.subr.mxu0 0.0
    %595 = vmatpush2.msra.mxu0 0.0
    %596 = vmatprep.subr.mxu0 0.0
    %597 = vmatpush2.msra.mxu0 0.0
    %598 = vmatprep.subr.mxu0 0.0
    %599 = vmatpush2.msra.mxu0 0.0
    %600 = vmatprep.subr.mxu0 0.0
    %601 = vmatpush2.msra.mxu0 0.0
    %602 = vmatprep.subr.mxu0 0.0
    %603 = vmatpush2.msra.mxu0 0.0
    %604 = vmatprep.subr.mxu0 0.0
    %605 = vmatpush2.msra.mxu0 0.0
    %606 = vmatprep.subr.mxu0 0.0
    %607 = vmatpush2.msra.mxu0 0.0
    %608 = vmatprep.subr.mxu0 0.0
    %609 = vmatpush2.msra.mxu0 0.0
    %610 = vmatprep.subr.mxu0 0.0
    %611 = vmatpush2.msra.mxu0 0.0
    %612 = vmatprep.subr.mxu0 0.0
    %613 = vmatpush2.msra.mxu0 0.0
    %614 = vmatprep.subr.mxu0 0.0
    %615 = vmatpush2.msra.mxu0 0.0
    %616 = vmatprep.subr.mxu0 0.0
    %617 = vmatpush2.msra.mxu0 0.0
    %618 = vmatprep.subr.mxu0 0.0
    %619 = vmatpush2.msra.mxu0 0.0
    %620 = vmatprep.subr.mxu0 0.0
    %621 = vmatpush2.msra.mxu0 0.0
    %622 = vmatprep.mubr.f32.mxu0 0.0
    %623 = vmatmul.mubr.f32.gmra.mxu0 %v547
    %v624 = vpop.f32.mrf.mxu0
    %v625 = vadd.f32 0.0, %v624
    %v626 = vpop.f32.mrf.mxu0
    %627 = vmatprep.mubr.f32.mxu0 0.0
    %628 = vmatmul.mubr.f32.gmra.mxu0 %v550
    %v629 = vpop.f32.mrf.mxu0
    %v630 = vadd.f32 0.0, %v629
    %v631 = vpop.f32.mrf.mxu0
    %632 = vmatprep.mubr.f32.mxu0 0.0
    %633 = vmatmul.mubr.f32.gmra.mxu0 %v553
    %v634 = vpop.f32.mrf.mxu0
    %v635 = vadd.f32 0.0, %v634
    %v636 = vpop.f32.mrf.mxu0
    %637 = vmatprep.mubr.f32.mxu0 0.0
    %638 = vmatmul.mubr.f32.gmra.mxu0 %v556
    %v639 = vpop.f32.mrf.mxu0
    %v640 = vadd.f32 0.0, %v639
    %v641 = vpop.f32.mrf.mxu0
    %642 = vdwg.mxu0
    %643 = vst.msk [vmem:[%s4] sm:$0xff] %vm372, %v625
    %644 = vst.msk [vmem:[%s4 + $0x8] sm:$0xff] %vm372, %v630
    %645 = vst.msk [vmem:[%s4 + $0x10] sm:$0xff] %vm372, %v635
    %646 = vst.msk [vmem:[%s4 + $0x18] sm:$0xff] %vm372, %v640
    %647 = vmatprep.subr.mxu0 0.0
    %648 = vmatpush1.xpose.msra.mxu0 0.0
    %649 = vmatprep.subr.mxu0 0.0
    %650 = vmatpush1.xpose.msra.mxu0 0.0
    %651 = vmatprep.subr.mxu0 0.0
    %652 = vmatpush1.xpose.msra.mxu0 0.0
    %653 = vmatprep.subr.mxu0 0.0
    %654 = vmatpush1.xpose.msra.mxu0 0.0
    %655 = vmatprep.subr.mxu0 0.0
    %656 = vmatpush1.xpose.msra.mxu0 0.0
    %657 = vmatprep.subr.mxu0 0.0
    %658 = vmatpush1.xpose.msra.mxu0 0.0
    %659 = vmatprep.subr.mxu0 0.0
    %660 = vmatpush1.xpose.msra.mxu0 0.0
    %661 = vmatprep.subr.mxu0 0.0
    %662 = vmatpush1.xpose.msra.mxu0 0.0
    %663 = vmatprep.subr.mxu0 0.0
    %664 = vmatpush1.xpose.msra.mxu0 0.0
    %665 = vmatprep.subr.mxu0 0.0
    %666 = vmatpush1.xpose.msra.mxu0 0.0
    %667 = vmatprep.subr.mxu0 0.0
    %668 = vmatpush1.xpose.msra.mxu0 0.0
    %669 = vmatprep.subr.mxu0 0.0
    %670 = vmatpush1.xpose.msra.mxu0 0.0
    %671 = vmatprep.subr.mxu0 0.0
    %672 = vmatpush1.xpose.msra.mxu0 0.0
    %673 = vmatprep.subr.mxu0 0.0
    %674 = vmatpush1.xpose.msra.mxu0 0.0
    %675 = vmatprep.subr.mxu0 0.0
    %676 = vmatpush1.xpose.msra.mxu0 0.0
    %677 = vmatprep.subr.mxu0 0.0
    %678 = vmatpush1.xpose.msra.mxu0 %v91
    %679 = vmatprep.subr.mxu0 0.0
    %680 = vmatpush2.xpose.msra.mxu0 0.0
    %681 = vmatprep.subr.mxu0 0.0
    %682 = vmatpush2.xpose.msra.mxu0 0.0
    %683 = vmatprep.subr.mxu0 0.0
    %684 = vmatpush2.xpose.msra.mxu0 0.0
    %685 = vmatprep.subr.mxu0 0.0
    %686 = vmatpush2.xpose.msra.mxu0 0.0
    %687 = vmatprep.subr.mxu0 0.0
    %688 = vmatpush2.xpose.msra.mxu0 0.0
    %689 = vmatprep.subr.mxu0 0.0
    %690 = vmatpush2.xpose.msra.mxu0 0.0
    %691 = vmatprep.subr.mxu0 0.0
    %692 = vmatpush2.xpose.msra.mxu0 0.0
    %693 = vmatprep.subr.mxu0 0.0
    %694 = vmatpush2.xpose.msra.mxu0 0.0
    %695 = vmatprep.subr.mxu0 0.0
    %696 = vmatpush2.xpose.msra.mxu0 0.0
    %697 = vmatprep.subr.mxu0 0.0
    %698 = vmatpush2.xpose.msra.mxu0 0.0
    %699 = vmatprep.subr.mxu0 0.0
    %700 = vmatpush2.xpose.msra.mxu0 0.0
    %701 = vmatprep.subr.mxu0 0.0
    %702 = vmatpush2.xpose.msra.mxu0 0.0
    %703 = vmatprep.subr.mxu0 0.0
    %704 = vmatpush2.xpose.msra.mxu0 0.0
    %705 = vmatprep.subr.mxu0 0.0
    %706 = vmatpush2.xpose.msra.mxu0 0.0
    %707 = vmatprep.subr.mxu0 0.0
    %708 = vmatpush2.xpose.msra.mxu0 0.0
    %709 = vmatprep.subr.mxu0 0.0
    %710 = vmatpush2.xpose.msra.mxu0 0.0
    %711 = vmatprep.mubr.f32.mxu0 0.0
    %712 = vmatmul.mubr.f32.gmra.mxu0 %v244
    %v713 = vpop.f32.mrf.mxu0
    %v714 = vadd.f32 0.0, %v713
    %v715 = vpop.f32.mrf.mxu0
    %716 = vmatprep.mubr.f32.mxu0 0.0
    %717 = vmatmul.mubr.f32.gmra.mxu0 %v247
    %v718 = vpop.f32.mrf.mxu0
    %v719 = vadd.f32 0.0, %v718
    %v720 = vpop.f32.mrf.mxu0
    %721 = vmatprep.mubr.f32.mxu0 0.0
    %722 = vmatmul.mubr.f32.gmra.mxu0 %v250
    %v723 = vpop.f32.mrf.mxu0
    %v724 = vadd.f32 0.0, %v723
    %v725 = vpop.f32.mrf.mxu0
    %726 = vmatprep.mubr.f32.mxu0 0.0
    %727 = vmatmul.mubr.f32.gmra.mxu0 %v253
    %v728 = vpop.f32.mrf.mxu0
    %v729 = vadd.f32 0.0, %v728
    %v730 = vpop.f32.mrf.mxu0
    %731 = vdwg.mxu0
    %732 = vxpose.xlu0.b32.start [1/16] %v240, 128
    %733 = vxpose.xlu0.b32.cont [2/16] 0.0, 128
    %734 = vxpose.xlu0.b32.cont [3/16] 0.0, 128
    %735 = vxpose.xlu0.b32.cont [4/16] 0.0, 128
    %736 = vxpose.xlu0.b32.cont [5/16] 0.0, 128
    %737 = vxpose.xlu0.b32.cont [6/16] 0.0, 128
    %738 = vxpose.xlu0.b32.cont [7/16] 0.0, 128
    %739 = vxpose.xlu0.b32.cont [8/16] 0.0, 128
    %740 = vxpose.xlu0.b32.cont [9/16] 0.0, 128
    %741 = vxpose.xlu0.b32.cont [10/16] 0.0, 128
    %742 = vxpose.xlu0.b32.cont [11/16] 0.0, 128
    %743 = vxpose.xlu0.b32.cont [12/16] 0.0, 128
    %744 = vxpose.xlu0.b32.cont [13/16] 0.0, 128
    %745 = vxpose.xlu0.b32.cont [14/16] 0.0, 128
    %746 = vxpose.xlu0.b32.cont [15/16] 0.0, 128
    %747 = vxpose.xlu0.b32.end [16/16] 0.0, 128
    %v748 = vpop.trf.xlu0
    %v749 = vpop.trf.xlu0
    %v750 = vpop.trf.xlu0
    %v751 = vpop.trf.xlu0
    %v752 = vpop.trf.xlu0
    %v753 = vpop.trf.xlu0
    %v754 = vpop.trf.xlu0
    %v755 = vpop.trf.xlu0
    %v756 = vpop.trf.xlu0
    %v757 = vpop.trf.xlu0
    %v758 = vpop.trf.xlu0
    %v759 = vpop.trf.xlu0
    %v760 = vpop.trf.xlu0
    %v761 = vpop.trf.xlu0
    %v762 = vpop.trf.xlu0
    %v763 = vpop.trf.xlu0
    %v765 = vsel %vm372, %v748, 0
    %v768 = vsel %vm372, %v749, 0
    %v771 = vsel %vm372, %v750, 0
    %v774 = vsel %vm372, %v751, 0
    %776 = vmatprep.subr.mxu0 0.0
    %777 = vmatpush1.msra.mxu0 0.0
    %778 = vmatprep.subr.mxu0 0.0
    %779 = vmatpush1.msra.mxu0 0.0
    %780 = vmatprep.subr.mxu0 0.0
    %781 = vmatpush1.msra.mxu0 0.0
    %782 = vmatprep.subr.mxu0 0.0
    %783 = vmatpush1.msra.mxu0 0.0
    %784 = vmatprep.subr.mxu0 0.0
    %785 = vmatpush1.msra.mxu0 0.0
    %786 = vmatprep.subr.mxu0 0.0
    %787 = vmatpush1.msra.mxu0 0.0
    %788 = vmatprep.subr.mxu0 0.0
    %789 = vmatpush1.msra.mxu0 0.0
    %790 = vmatprep.subr.mxu0 0.0
    %791 = vmatpush1.msra.mxu0 0.0
    %792 = vmatprep.subr.mxu0 0.0
    %793 = vmatpush1.msra.mxu0 0.0
    %794 = vmatprep.subr.mxu0 0.0
    %795 = vmatpush1.msra.mxu0 0.0
    %796 = vmatprep.subr.mxu0 0.0
    %797 = vmatpush1.msra.mxu0 0.0
    %798 = vmatprep.subr.mxu0 0.0
    %799 = vmatpush1.msra.mxu0 0.0
    %800 = vmatprep.subr.mxu0 0.0
    %801 = vmatpush1.msra.mxu0 0.0
    %802 = vmatprep.subr.mxu0 0.0
    %803 = vmatpush1.msra.mxu0 0.0
    %804 = vmatprep.subr.mxu0 0.0
    %805 = vmatpush1.msra.mxu0 0.0
    %806 = vmatprep.subr.mxu0 0.0
    %807 = vmatpush1.msra.mxu0 %v165
    %808 = vmatprep.subr.mxu0 0.0
    %809 = vmatpush2.msra.mxu0 0.0
    %810 = vmatprep.subr.mxu0 0.0
    %811 = vmatpush2.msra.mxu0 0.0
    %812 = vmatprep.subr.mxu0 0.0
    %813 = vmatpush2.msra.mxu0 0.0
    %814 = vmatprep.subr.mxu0 0.0
    %815 = vmatpush2.msra.mxu0 0.0
    %816 = vmatprep.subr.mxu0 0.0
    %817 = vmatpush2.msra.mxu0 0.0
    %818 = vmatprep.subr.mxu0 0.0
    %819 = vmatpush2.msra.mxu0 0.0
    %820 = vmatprep.subr.mxu0 0.0
    %821 = vmatpush2.msra.mxu0 0.0
    %822 = vmatprep.subr.mxu0 0.0
    %823 = vmatpush2.msra.mxu0 0.0
    %824 = vmatprep.subr.mxu0 0.0
    %825 = vmatpush2.msra.mxu0 0.0
    %826 = vmatprep.subr.mxu0 0.0
    %827 = vmatpush2.msra.mxu0 0.0
    %828 = vmatprep.subr.mxu0 0.0
    %829 = vmatpush2.msra.mxu0 0.0
    %830 = vmatprep.subr.mxu0 0.0
    %831 = vmatpush2.msra.mxu0 0.0
    %832 = vmatprep.subr.mxu0 0.0
    %833 = vmatpush2.msra.mxu0 0.0
    %834 = vmatprep.subr.mxu0 0.0
    %835 = vmatpush2.msra.mxu0 0.0
    %836 = vmatprep.subr.mxu0 0.0
    %837 = vmatpush2.msra.mxu0 0.0
    %838 = vmatprep.subr.mxu0 0.0
    %839 = vmatpush2.msra.mxu0 0.0
    %840 = vmatprep.mubr.f32.mxu0 0.0
    %841 = vmatmul.mubr.f32.gmra.mxu0 %v765
    %v842 = vpop.f32.mrf.mxu0
    %v843 = vadd.f32 0.0, %v842
    %v844 = vpop.f32.mrf.mxu0
    %845 = vmatprep.mubr.f32.mxu0 0.0
    %846 = vmatmul.mubr.f32.gmra.mxu0 %v768
    %v847 = vpop.f32.mrf.mxu0
    %v848 = vadd.f32 0.0, %v847
    %v849 = vpop.f32.mrf.mxu0
    %850 = vmatprep.mubr.f32.mxu0 0.0
    %851 = vmatmul.mubr.f32.gmra.mxu0 %v771
    %v852 = vpop.f32.mrf.mxu0
    %v853 = vadd.f32 0.0, %v852
    %v854 = vpop.f32.mrf.mxu0
    %855 = vmatprep.mubr.f32.mxu0 0.0
    %856 = vmatmul.mubr.f32.gmra.mxu0 %v774
    %v857 = vpop.f32.mrf.mxu0
    %v858 = vadd.f32 0.0, %v857
    %v859 = vpop.f32.mrf.mxu0
    %860 = vdwg.mxu0
    %v861 = vsel %vm86, %v843, -inf
    %862 = vmax.xlane.f32.xlu0 %v861
    %v863 = vpop.xlane.xlu0 %862
    %v864 = vsel %vm86, %v848, -inf
    %865 = vmax.xlane.f32.xlu0 %v864
    %v866 = vpop.xlane.xlu0 %865
    %v867 = vsel %vm86, %v853, -inf
    %868 = vmax.xlane.f32.xlu0 %v867
    %v869 = vpop.xlane.xlu0 %868
    %v870 = vsel %vm86, %v858, -inf
    %871 = vmax.xlane.f32.xlu0 %v870
    %v872 = vpop.xlane.xlu0 %871
    %v873 = vsub.f32 %v843, %v863
    %v874 = vsub.f32 %v848, %v866
    %v875 = vsub.f32 %v853, %v869
    %v876 = vsub.f32 %v858, %v872
    %v877 = vmul.f32 %v873, 1.442695
    %v878 = vpow.pop %v877
    %v879 = vmul.f32 %v874, 1.442695
    %v880 = vpow.pop %v879
    %v881 = vmul.f32 %v875, 1.442695
    %v882 = vpow.pop %v881
    %v883 = vmul.f32 %v876, 1.442695
    %v884 = vpow.pop %v883
    %v885 = vsel %vm86, %v878, 0.0
    %886 = vadd.xlane.f32.xlu0 %v885
    %v887 = vpop.xlane.xlu0 %886
    %v888 = vsel %vm86, %v880, 0.0
    %889 = vadd.xlane.f32.xlu0 %v888
    %v890 = vpop.xlane.xlu0 %889
    %v891 = vsel %vm86, %v882, 0.0
    %892 = vadd.xlane.f32.xlu0 %v891
    %v893 = vpop.xlane.xlu0 %892
    %v894 = vsel %vm86, %v884, 0.0
    %895 = vadd.xlane.f32.xlu0 %v894
    %v896 = vpop.xlane.xlu0 %895
    %v897 = vrcp.pop %v887
    %v898 = vmul.f32 %v878, %v897
    %v899 = vrcp.pop %v890
    %v900 = vmul.f32 %v880, %v899
    %v901 = vrcp.pop %v893
    %v902 = vmul.f32 %v882, %v901
    %v903 = vrcp.pop %v896
    %v904 = vmul.f32 %v884, %v903
    %905 = vxpose.xlu0.b32.start [1/16] %v898, 128
    %906 = vxpose.xlu0.b32.cont [2/16] %v900, 128
    %907 = vxpose.xlu0.b32.cont [3/16] %v902, 128
    %908 = vxpose.xlu0.b32.cont [4/16] %v904, 128
    %909 = vxpose.xlu0.b32.cont [5/16] 0.0, 128
    %910 = vxpose.xlu0.b32.cont [6/16] 0.0, 128
    %911 = vxpose.xlu0.b32.cont [7/16] 0.0, 128
    %912 = vxpose.xlu0.b32.cont [8/16] 0.0, 128
    %913 = vxpose.xlu0.b32.cont [9/16] 0.0, 128
    %914 = vxpose.xlu0.b32.cont [10/16] 0.0, 128
    %915 = vxpose.xlu0.b32.cont [11/16] 0.0, 128
    %916 = vxpose.xlu0.b32.cont [12/16] 0.0, 128
    %917 = vxpose.xlu0.b32.cont [13/16] 0.0, 128
    %918 = vxpose.xlu0.b32.cont [14/16] 0.0, 128
    %919 = vxpose.xlu0.b32.cont [15/16] 0.0, 128
    %920 = vxpose.xlu0.b32.end [16/16] 0.0, 128
    %v921 = vpop.trf.xlu0
    %v922 = vpop.trf.xlu0
    %v923 = vpop.trf.xlu0
    %v924 = vpop.trf.xlu0
    %v925 = vpop.trf.xlu0
    %v926 = vpop.trf.xlu0
    %v927 = vpop.trf.xlu0
    %v928 = vpop.trf.xlu0
    %v929 = vpop.trf.xlu0
    %v930 = vpop.trf.xlu0
    %v931 = vpop.trf.xlu0
    %v932 = vpop.trf.xlu0
    %v933 = vpop.trf.xlu0
    %v934 = vpop.trf.xlu0
    %v935 = vpop.trf.xlu0
    %v936 = vpop.trf.xlu0
    %v938 = vsel %vm86, %v921, 0
    %v941 = vsel %vm86, %v922, 0
    %v944 = vsel %vm86, %v923, 0
    %v947 = vsel %vm86, %v924, 0
    %949 = vmatprep.subr.mxu0 0.0
    %950 = vmatpush1.msra.mxu0 0.0
    %951 = vmatprep.subr.mxu0 0.0
    %952 = vmatpush1.msra.mxu0 0.0
    %953 = vmatprep.subr.mxu0 0.0
    %954 = vmatpush1.msra.mxu0 0.0
    %955 = vmatprep.subr.mxu0 0.0
    %956 = vmatpush1.msra.mxu0 0.0
    %957 = vmatprep.subr.mxu0 0.0
    %958 = vmatpush1.msra.mxu0 0.0
    %959 = vmatprep.subr.mxu0 0.0
    %960 = vmatpush1.msra.mxu0 0.0
    %961 = vmatprep.subr.mxu0 0.0
    %962 = vmatpush1.msra.mxu0 0.0
    %963 = vmatprep.subr.mxu0 0.0
    %964 = vmatpush1.msra.mxu0 0.0
    %965 = vmatprep.subr.mxu0 0.0
    %966 = vmatpush1.msra.mxu0 0.0
    %967 = vmatprep.subr.mxu0 0.0
    %968 = vmatpush1.msra.mxu0 0.0
    %969 = vmatprep.subr.mxu0 0.0
    %970 = vmatpush1.msra.mxu0 0.0
    %971 = vmatprep.subr.mxu0 0.0
    %972 = vmatpush1.msra.mxu0 0.0
    %973 = vmatprep.subr.mxu0 0.0
    %974 = vmatpush1.msra.mxu0 %v729
    %975 = vmatprep.subr.mxu0 0.0
    %976 = vmatpush1.msra.mxu0 %v724
    %977 = vmatprep.subr.mxu0 0.0
    %978 = vmatpush1.msra.mxu0 %v719
    %979 = vmatprep.subr.mxu0 0.0
    %980 = vmatpush1.msra.mxu0 %v714
    %981 = vmatprep.subr.mxu0 0.0
    %982 = vmatpush2.msra.mxu0 0.0
    %983 = vmatprep.subr.mxu0 0.0
    %984 = vmatpush2.msra.mxu0 0.0
    %985 = vmatprep.subr.mxu0 0.0
    %986 = vmatpush2.msra.mxu0 0.0
    %987 = vmatprep.subr.mxu0 0.0
    %988 = vmatpush2.msra.mxu0 0.0
    %989 = vmatprep.subr.mxu0 0.0
    %990 = vmatpush2.msra.mxu0 0.0
    %991 = vmatprep.subr.mxu0 0.0
    %992 = vmatpush2.msra.mxu0 0.0
    %993 = vmatprep.subr.mxu0 0.0
    %994 = vmatpush2.msra.mxu0 0.0
    %995 = vmatprep.subr.mxu0 0.0
    %996 = vmatpush2.msra.mxu0 0.0
    %997 = vmatprep.subr.mxu0 0.0
    %998 = vmatpush2.msra.mxu0 0.0
    %999 = vmatprep.subr.mxu0 0.0
    %1000 = vmatpush2.msra.mxu0 0.0
    %1001 = vmatprep.subr.mxu0 0.0
    %1002 = vmatpush2.msra.mxu0 0.0
    %1003 = vmatprep.subr.mxu0 0.0
    %1004 = vmatpush2.msra.mxu0 0.0
    %1005 = vmatprep.subr.mxu0 0.0
    %1006 = vmatpush2.msra.mxu0 0.0
    %1007 = vmatprep.subr.mxu0 0.0
    %1008 = vmatpush2.msra.mxu0 0.0
    %1009 = vmatprep.subr.mxu0 0.0
    %1010 = vmatpush2.msra.mxu0 0.0
    %1011 = vmatprep.subr.mxu0 0.0
    %1012 = vmatpush2.msra.mxu0 0.0
    %1013 = vmatprep.mubr.f32.mxu0 0.0
    %1014 = vmatmul.mubr.f32.gmra.mxu0 %v938
    %v1015 = vpop.f32.mrf.mxu0
    %v1016 = vadd.f32 0.0, %v1015
    %v1017 = vpop.f32.mrf.mxu0
    %1018 = vmatprep.mubr.f32.mxu0 0.0
    %1019 = vmatmul.mubr.f32.gmra.mxu0 %v941
    %v1020 = vpop.f32.mrf.mxu0
    %v1021 = vadd.f32 0.0, %v1020
    %v1022 = vpop.f32.mrf.mxu0
    %1023 = vmatprep.mubr.f32.mxu0 0.0
    %1024 = vmatmul.mubr.f32.gmra.mxu0 %v944
    %v1025 = vpop.f32.mrf.mxu0
    %v1026 = vadd.f32 0.0, %v1025
    %v1027 = vpop.f32.mrf.mxu0
    %1028 = vmatprep.mubr.f32.mxu0 0.0
    %1029 = vmatmul.mubr.f32.gmra.mxu0 %v947
    %v1030 = vpop.f32.mrf.mxu0
    %v1031 = vadd.f32 0.0, %v1030
    %v1032 = vpop.f32.mrf.mxu0
    %1033 = vdwg.mxu0
    %s1034 = scalar_lea.vmem %s4, 32
    %1035 = vst.msk [vmem:[%s1034] sm:$0xff] %vm372, %v1016
    %1036 = vst.msk [vmem:[%s1034 + $0x8] sm:$0xff] %vm372, %v1021
    %1037 = vst.msk [vmem:[%s1034 + $0x10] sm:$0xff] %vm372, %v1026
    %1038 = vst.msk [vmem:[%s1034 + $0x18] sm:$0xff] %vm372, %v1031
    // Predicated region
    $region34: #{attention.1} parent=1 // pred_check
      _
    $region35: #{attention.1} parent=1 // pred_check_branch
      %1040 = sbr.rel (0) target = $region37
    $region36: #{attention.1} parent=1 // pred_region
      _
    $region37: #{attention.1} parent=1 // pred_fallthru
      _
    // Predicated region
    $region38: #{attention.1} parent=1 // pred_check
      _
    $region39: #{attention.1} parent=1 // pred_check_branch
      %1042 = sbr.rel (0) target = $region41
    $region40: #{attention.1} parent=1 // pred_region
      _
    $region41: #{attention.1} parent=1 // pred_fallthru
      _
    %1043 = vsyncpa [#allocation3], 1
    %1044 = vsyncpa [#allocation5], 1
    %1045 = vsyncpa [#allocation8], 1

</llo_original>
